<compile_context>
chip_gen: v7x
topology: tpu7x:2x2x1
jax: 0.10.0
libtpu: 0.0.40
codegen_flags: <defaults>
</compile_context>

<pallas_src>
import jax
import jax.numpy as jnp
from jax.experimental import pallas as pl
from jax.experimental.pallas import tpu as pltpu


def _round_up(x: int, m: int) -> int:
    return ((x + m - 1) // m) * m


def mlp_kernel(z_ref, w1_ref, b1_ref, w2_ref, b2_ref, out_ref):
    # fc1 on the MXU: bf16 inputs, f32 accumulation.
    z = z_ref[...]
    if z.dtype != jnp.bfloat16:
        z = z.astype(jnp.bfloat16)                        # cast at load (VPU)
    h = jnp.dot(z, w1_ref[...],
                preferred_element_type=jnp.float32)       # (TB, 256) f32 accum
    h = jnp.maximum(h + b1_ref[...], 0.0)                 # bias + ReLU (VPU)
    # fc2 (N=1): VPU multiply + lane (XLU) reduction instead of a 1-column matmul.
    y = jnp.sum(h * w2_ref[...], axis=-1, keepdims=True)  # (TB, 1)
    out_ref[...] = y + b2_ref[0, 0]                       # scalar bias from SMEM


def mlp_forward(z, w1, b1, w2, b2, *, block_b: int = 8192):
    """Matches the PyTorch module: relu(z @ W1 + b1) @ W2 + b2, flattened to (B,)."""
    z = jnp.asarray(z)                   # keep caller's dtype (bf16 halves HBM traffic)
    B, F = z.shape                       # F = 88
    H = w1.shape[1]                      # H = 256

    if B == 0:                           # degenerate batch guard (review correctness note)
        return jnp.zeros((0,), jnp.float32)

    # Sublane multiple for the batch tile: 8 for 4-byte dtypes, 16 for bf16.
    itemsize = jnp.dtype(z.dtype).itemsize
    sub = 8 * max(1, 4 // itemsize)
    tb = min(_round_up(block_b, sub), _round_up(B, sub))
    if B >= 1024:
        # Keep >= 2 grid steps for large batches so v7x's 2 TensorCores both
        # get work on the "parallel" batch axis (harmless on v5e/v6e).
        tb = min(tb, _round_up((B + 1) // 2, sub))
    tb = max(tb, sub)
    grid = (pl.cdiv(B, tb),)             # trailing partial block handled by Pallas

    w1_bf16 = w1.astype(jnp.bfloat16)                 # one-time weight cast for the MXU
    b1_row = b1.reshape(1, H).astype(jnp.float32)
    w2_row = w2.reshape(1, H).astype(jnp.float32)     # fc2 weights as a lane-dense row
    b2_s = b2.reshape(1, 1).astype(jnp.float32)       # scalar bias -> SMEM

    out = pl.pallas_call(
        mlp_kernel,
        out_shape=jax.ShapeDtypeStruct((B, 1), jnp.float32),
        grid_spec=pltpu.PrefetchScalarGridSpec(
            num_scalar_prefetch=0,
            grid=grid,
            in_specs=[
                pl.BlockSpec((tb, F), lambda i: (i, 0)),   # z: streamed / double-buffered
                pl.BlockSpec((F, H), lambda i: (0, 0)),    # W1: VMEM-resident
                pl.BlockSpec((1, H), lambda i: (0, 0)),    # b1: VMEM-resident
                pl.BlockSpec((1, H), lambda i: (0, 0)),    # w2 row: VMEM-resident
                pl.BlockSpec(memory_space=pltpu.SMEM),     # b2: SMEM scalar
            ],
            out_specs=pl.BlockSpec((tb, 1), lambda i: (i, 0)),
        ),
        compiler_params=pltpu.CompilerParams(
            dimension_semantics=("parallel",),             # v7x: shard batch over 2 TCs
            vmem_limit_bytes=48 * 1024 * 1024,             # TB=8192 column-out ~28 MiB
        ),
        cost_estimate=pl.CostEstimate(
            flops=2 * B * F * H + 4 * B * H,
            bytes_accessed=B * F * itemsize + F * H * 2 + 2 * H * 4 + 4 + B * 4,
            transcendentals=0,
        ),
    )(z, w1_bf16, b1_row, w2_row, b2_s)

    return out[:, 0]                                       # matches torch .view(-1)


def init_params(key):
    # Deterministic synthetic init (PyTorch-Linear-style uniform bounds).
    k1, k2, k3, k4 = jax.random.split(key, 4)
    in1, out1 = 88, 256
    in2, out2 = 256, 1
    bound1 = 1.0 / jnp.sqrt(in1)
    bound2 = 1.0 / jnp.sqrt(in2)
    # stored transposed relative to torch's (out, in) so the kernel does z @ W
    w1 = jax.random.uniform(k1, (in1, out1), jnp.float32, -bound1, bound1)
    b1 = jax.random.uniform(k2, (1, out1), jnp.float32, -bound1, bound1)
    w2 = jax.random.uniform(k3, (in2, out2), jnp.float32, -bound2, bound2)
    b2 = jax.random.uniform(k4, (1, out2), jnp.float32, -bound2, bound2)
    return w1, b1, w2, b2


if __name__ == "__main__":
    key = jax.random.PRNGKey(0)
    kz, kp, kz2, kz3 = jax.random.split(key, 4)
    w1, b1, w2, b2 = init_params(kp)

    def ref_fn(zz):
        zz = zz.astype(jnp.float32)
        return (jnp.maximum(zz @ w1 + b1, 0.0) @ w2 + b2).reshape(-1)

    # Small single-tile check.
    B = 8
    z = jax.random.normal(kz, (B, 88), jnp.float32)
    y = mlp_forward(z, w1, b1, w2, b2)
    jax.block_until_ready(y)
    assert y.shape == (B,)
    # bf16 MXU inputs with f32 accumulation -> loosened tolerance vs f32 reference.
    assert jnp.allclose(y, ref_fn(z), atol=2e-2, rtol=2e-2)

    # Multi-tile check with a ragged tail: grid=3, partial last block, no wrapper pad.
    B2 = 300
    z2 = jax.random.normal(kz2, (B2, 88), jnp.float32)
    y2 = mlp_forward(z2, w1, b1, w2, b2, block_b=128)
    jax.block_until_ready(y2)
    assert y2.shape == (B2,)
    assert jnp.allclose(y2, ref_fn(z2), atol=2e-2, rtol=2e-2)

    # Caller-provided bf16 z path (halves the dominant HBM stream).
    B3 = 256
    z3 = jax.random.normal(kz3, (B3, 88), jnp.float32).astype(jnp.bfloat16)
    y3 = mlp_forward(z3, w1, b1, w2, b2, block_b=128)
    jax.block_until_ready(y3)
    assert y3.shape == (B3,)
    assert jnp.allclose(y3, ref_fn(z3), atol=2e-2, rtol=2e-2)

    print("KERNEL_OK")
</pallas_src>

<mosaic_0001>
module attributes {stable_mosaic.version = 11 : i64} {
  func.func @mlp_kernel(%arg0: i32, %arg1: memref<8x88xf32, #tpu.memory_space<vmem>>, %arg2: memref<88x256xbf16, #tpu.memory_space<vmem>>, %arg3: memref<1x256xf32, #tpu.memory_space<vmem>>, %arg4: memref<1x256xf32, #tpu.memory_space<vmem>>, %arg5: memref<1x1xf32, #tpu.memory_space<smem>>, %arg6: memref<8x1xf32, #tpu.memory_space<vmem>>) attributes {dimension_semantics = [#tpu.dimension_semantics<parallel>], iteration_bounds = array<i64: 1>, scalar_prefetch = 0 : i64, scratch_operands = 0 : i64, tpu.core_type = #tpu.core_type<tc>, window_params = [{transform_indices = @transform_0, window_bounds = array<i64: 8, 88>}, {pipeline_mode = #tpu.pipeline_mode<synchronous>, transform_indices = @transform_1, window_bounds = array<i64: 88, 256>}, {pipeline_mode = #tpu.pipeline_mode<synchronous>, transform_indices = @transform_2, window_bounds = array<i64: 1, 256>}, {pipeline_mode = #tpu.pipeline_mode<synchronous>, transform_indices = @transform_3, window_bounds = array<i64: 1, 256>}, {transform_indices = @transform_4, window_bounds = array<i64: 1, 1>}, {transform_indices = @transform_5, window_bounds = array<i64: 8, 1>}]} {
    %c0 = arith.constant 0 : index
    %c0_0 = arith.constant 0 : index
    %0 = vector.load %arg1[%c0, %c0_0] : memref<8x88xf32, #tpu.memory_space<vmem>>, vector<8x88xf32>
    %1 = arith.truncf %0 : vector<8x88xf32> to vector<8x88xbf16>
    %c0_1 = arith.constant 0 : index
    %c0_2 = arith.constant 0 : index
    %2 = vector.load %arg2[%c0_1, %c0_2] : memref<88x256xbf16, #tpu.memory_space<vmem>>, vector<88x256xbf16>
    %cst = arith.constant dense<0.000000e+00> : vector<8x256xf32>
    %3 = tpu.matmul %1, %2, %cst {dimension_numbers = #tpu.dot_dimension_numbers<[1], [0], [0], [1], [0, 0, 1, 1], [], []>} : vector<8x88xbf16>, vector<88x256xbf16>, vector<8x256xf32> -> vector<8x256xf32>
    %c0_3 = arith.constant 0 : index
    %c0_4 = arith.constant 0 : index
    %4 = vector.load %arg3[%c0_3, %c0_4] : memref<1x256xf32, #tpu.memory_space<vmem>>, vector<1x256xf32>
    %5 = vector.broadcast %4 : vector<1x256xf32> to vector<8x256xf32>
    %6 = arith.addf %3, %5 : vector<8x256xf32>
    %cst_5 = arith.constant 0.000000e+00 : f32
    %7 = vector.broadcast %cst_5 : f32 to vector<8x256xf32>
    %8 = arith.maximumf %6, %7 : vector<8x256xf32>
    %c0_6 = arith.constant 0 : index
    %c0_7 = arith.constant 0 : index
    %9 = vector.load %arg4[%c0_6, %c0_7] : memref<1x256xf32, #tpu.memory_space<vmem>>, vector<1x256xf32>
    %10 = vector.broadcast %9 : vector<1x256xf32> to vector<8x256xf32>
    %11 = arith.mulf %8, %10 : vector<8x256xf32>
    %cst_8 = arith.constant dense<0.000000e+00> : vector<8xf32>
    %12 = vector.multi_reduction <add>, %11, %cst_8 [1] : vector<8x256xf32> to vector<8xf32>
    %13 = vector.shape_cast %12 : vector<8xf32> to vector<8x1xf32>
    %c0_9 = arith.constant 0 : index
    %c0_10 = arith.constant 0 : index
    %14 = memref.load %arg5[%c0_9, %c0_10] : memref<1x1xf32, #tpu.memory_space<smem>>
    %15 = vector.broadcast %14 : f32 to vector<8x1xf32>
    %16 = arith.addf %13, %15 : vector<8x1xf32>
    %c0_11 = arith.constant 0 : index
    %c0_12 = arith.constant 0 : index
    %17 = vector.load %arg6[%c0_11, %c0_12] : memref<8x1xf32, #tpu.memory_space<vmem>>, vector<8x1xf32>
    tpu.vector_store %arg6[%c0_11, %c0_12], %16 {strides = array<i32>} : memref<8x1xf32, #tpu.memory_space<vmem>>, vector<8x1xf32>,
    return
  }
  func.func @transform_0(%arg0: i32) -> (i32, i32) {
    %c0_i32 = arith.constant 0 : i32
    %c0_i32_0 = arith.constant 0 : i32
    return %arg0, %c0_i32 : i32, i32
  }
  func.func @transform_1(%arg0: i32) -> (i32, i32) {
    %c0_i32 = arith.constant 0 : i32
    %c0_i32_0 = arith.constant 0 : i32
    %c0_i32_1 = arith.constant 0 : i32
    return %c0_i32, %c0_i32_0 : i32, i32
  }
  func.func @transform_2(%arg0: i32) -> (i32, i32) {
    %c0_i32 = arith.constant 0 : i32
    %c0_i32_0 = arith.constant 0 : i32
    %c0_i32_1 = arith.constant 0 : i32
    return %c0_i32, %c0_i32_0 : i32, i32
  }
  func.func @transform_3(%arg0: i32) -> (i32, i32) {
    %c0_i32 = arith.constant 0 : i32
    %c0_i32_0 = arith.constant 0 : i32
    %c0_i32_1 = arith.constant 0 : i32
    return %c0_i32, %c0_i32_0 : i32, i32
  }
  func.func @transform_4(%arg0: i32) -> (i32, i32) {
    %c0_i32 = arith.constant 0 : i32
    %c0_i32_0 = arith.constant 0 : i32
    %c0_i32_1 = arith.constant 0 : i32
    return %c0_i32, %c0_i32_0 : i32, i32
  }
  func.func @transform_5(%arg0: i32) -> (i32, i32) {
    %c0_i32 = arith.constant 0 : i32
    %c0_i32_0 = arith.constant 0 : i32
    return %arg0, %c0_i32 : i32, i32
  }
}

</mosaic_0001>

<llo_original>
// kernel: tpu_custom_call.1
$region0: #{tpu_custom_call.1}
  #allocation0 [shape = 'u32[]', space=smem, size = 0x4, offset = 0x4, fixed_abs, tag = 'smem constant byte address 0x4 - core index']
  #allocation1 [shape = 'u32[144,128]{1,0:T(1,128)}', space=vmem, size = 0x12000, scoped, tag = 'internal scratch']
  #allocation2 [shape = 'f32[1,1]{1,0:T(1,128)S(6)}', space=smem, size = 0x200, scoped, tag = 'scoped memory for tpu_custom_call.1']
  %s0 = inlined_call_operand.hbm [shape: f32[8,88], index: 0, kind: input, shape index: {}]
  %s1 = inlined_call_operand.hbm [shape: bf16[88,256], index: 1, kind: input, shape index: {}]
  %s2 = inlined_call_operand.vmem [shape: f32[1,256], index: 2, kind: input, shape index: {}]
  %s3 = inlined_call_operand.vmem [shape: f32[1,256], index: 3, kind: input, shape index: {}]
  %s4 = inlined_call_operand.<no memory space> [shape: f32[1,1], index: 4, kind: input, shape index: {}]
  %s5 = inlined_call_operand.vmem [shape: f32[8,1], index: 5, kind: output, shape index: {}]
  %s6 = sld [smem:[#allocation0]]
  $region38: #{tpu_custom_call.1} parent=0
    _
  %s8 = ssub.s32 1, %s6
  %s9 = scalar_select 0, %s8, %s6
  %10 = sst [smem:[#allocation2]] %s4
  $region1: #{tpu_custom_call.1} parent=0
    #allocation3 [shape = 'u8[4096]{0}', space=vmem, size = 0x1000, scoped, tag = 'input window, operand 0, single buffered']
    #allocation4 [shape = 's32[1]{0}', space=sflag, size = 0x4, scoped, tag = 'scoped memory for tpu_custom_call.1']
    #allocation5 [shape = 'u8[45056]{0}', space=vmem, size = 0xb000, scoped, tag = 'input window, operand 1, single buffered']
    #allocation6 [shape = 's32[1]{0}', space=sflag, size = 0x4, scoped, tag = 'scoped memory for tpu_custom_call.1']
    %11 = vsyncpa [#allocation4], 0
    %12 = vsyncpa [#allocation6], 0
    // Predicated region
    $region2: #{tpu_custom_call.1} parent=1 // pred_check
      _
    $region3: #{tpu_custom_call.1} parent=1 // pred_check_branch
      %14 = sbr.rel (0) target = $region5
    $region4: #{tpu_custom_call.1} parent=1 // pred_region
      %s16 = ssub.s32 128, 128
      %17 = vsyncadd [#allocation4], %s16
      %s19 = sshll.u32 [#allocation3], 4
      %s20 = int_to_ptr.vmem [resolvable:$true] %s19
      %22 = dma.hbm_to_vmem [thread:$0]  %s0, 128, %s20, [#allocation4]
    $region5: #{tpu_custom_call.1} parent=1 // pred_fallthru
      _
    // Predicated region
    $region6: #{tpu_custom_call.1} parent=1 // pred_check
      _
    $region7: #{tpu_custom_call.1} parent=1 // pred_check_branch
      %24 = sbr.rel (0) target = $region9
    $region8: #{tpu_custom_call.1} parent=1 // pred_region
      %s26 = ssub.s32 1408, 1408
      %27 = vsyncadd [#allocation6], %s26
      %s28 = sshll.u32 [#allocation5], 4
      %s29 = int_to_ptr.vmem [resolvable:$true] %s28
      %34 = dma.hbm_to_vmem [thread:$0]  %s1, 1408, %s29, [#allocation6], 128, 128, 8
    $region9: #{tpu_custom_call.1} parent=1 // pred_fallthru
      _
    // Predicated region
    $region10: #{tpu_custom_call.1} parent=1 // pred_check
      _
    $region11: #{tpu_custom_call.1} parent=1 // pred_check_branch
      %36 = sbr.rel (0) target = $region13
    $region12: #{tpu_custom_call.1} parent=1 // pred_region
      _
    $region13: #{tpu_custom_call.1} parent=1 // pred_fallthru
      _
    // Predicated region
    $region14: #{tpu_custom_call.1} parent=1 // pred_check
      _
    $region15: #{tpu_custom_call.1} parent=1 // pred_check_branch
      %38 = sbr.rel (0) target = $region17
    $region16: #{tpu_custom_call.1} parent=1 // pred_region
      _
    $region17: #{tpu_custom_call.1} parent=1 // pred_fallthru
      _
    // Predicated region
    $region18: #{tpu_custom_call.1} parent=1 // pred_check
      _
    $region19: #{tpu_custom_call.1} parent=1 // pred_check_branch
      %40 = sbr.rel (0) target = $region21
    $region20: #{tpu_custom_call.1} parent=1 // pred_region
      _
    $region21: #{tpu_custom_call.1} parent=1 // pred_fallthru
      _
    // Predicated region
    $region22: #{tpu_custom_call.1} parent=1 // pred_check
      _
    $region23: #{tpu_custom_call.1} parent=1 // pred_check_branch
      %42 = sbr.rel (0) target = $region25
    $region24: #{tpu_custom_call.1} parent=1 // pred_region
      %43 = dma.done [#allocation4], 128
    $region25: #{tpu_custom_call.1} parent=1 // pred_fallthru
      _
    // Predicated region
    $region26: #{tpu_custom_call.1} parent=1 // pred_check
      _
    $region27: #{tpu_custom_call.1} parent=1 // pred_check_branch
      %45 = sbr.rel (0) target = $region29
    $region28: #{tpu_custom_call.1} parent=1 // pred_region
      %46 = dma.done [#allocation6], 1408
    $region29: #{tpu_custom_call.1} parent=1 // pred_fallthru
      _
    %v48 = vld [vmem:[#allocation3] sm:$0xff]
    %v49 = vpack.c.bf16 %v48, %v48
    %v50 = vld [vmem:[#allocation5] sm:$0xff]
    %v51 = vld [vmem:[#allocation5 + $0x8] sm:$0xff]
    %v52 = vld [vmem:[#allocation5 + $0x10] sm:$0xff]
    %v53 = vld [vmem:[#allocation5 + $0x18] sm:$0xff]
    %v54 = vld [vmem:[#allocation5 + $0x20] sm:$0xff]
    %v55 = vld [vmem:[#allocation5 + $0x28] sm:$0xff]
    %v56 = vld [vmem:[#allocation5 + $0x30] sm:$0xff]
    %v57 = vld [vmem:[#allocation5 + $0x38] sm:$0xff]
    %v58 = vld [vmem:[#allocation5 + $0x40] sm:$0xff]
    %v59 = vld [vmem:[#allocation5 + $0x48] sm:$0xff]
    %v60 = vld [vmem:[#allocation5 + $0x50] sm:$0xff]
    %v61 = vld [vmem:[%s2] sm:$0x3]
    %v63 = vlaneseq
    %v64 = vshrl.u32 %v63, 7
    %v65 = vsub.s32 0, %v64
    %v66 = vrot.slane %v61, %v65
    %v67 = vlaneseq
    %v68 = vshrl.u32 %v67, 7
    %v69 = vsub.s32 1, %v68
    %v70 = vrot.slane %v61, %v69
    %v84 = vunpack.c.l.b16 %v50
    %v85 = vunpack.c.h.b16 %v50
    %v86 = vunpack.c.l.b16 %v51
    %v87 = vunpack.c.h.b16 %v51
    %v88 = vunpack.c.l.b16 %v52
    %v89 = vunpack.c.h.b16 %v52
    %v90 = vunpack.c.l.b16 %v53
    %v91 = vunpack.c.h.b16 %v53
    %v92 = vunpack.c.l.b16 %v54
    %v93 = vunpack.c.h.b16 %v54
    %v94 = vunpack.c.l.b16 %v55
    %v95 = vunpack.c.h.b16 %v55
    %v96 = vunpack.c.l.b16 %v56
    %v97 = vunpack.c.h.b16 %v56
    %v98 = vunpack.c.l.b16 %v57
    %v99 = vunpack.c.h.b16 %v57
    %v100 = vunpack.c.l.b16 %v58
    %v101 = vunpack.c.h.b16 %v58
    %v102 = vunpack.c.l.b16 %v59
    %v103 = vunpack.c.h.b16 %v59
    %v104 = vunpack.c.l.b16 %v60
    %v105 = vunpack.c.h.b16 %v60
    %v106 = vpack.c.b16 %v86, %v84
    %v107 = vpack.c.b16 %v87, %v85
    %v108 = vpack.c.b16 %v90, %v88
    %v109 = vpack.c.b16 %v91, %v89
    %v110 = vpack.c.b16 %v94, %v92
    %v111 = vpack.c.b16 %v95, %v93
    %v112 = vpack.c.b16 %v98, %v96
    %v113 = vpack.c.b16 %v99, %v97
    %v114 = vpack.c.b16 %v102, %v100
    %v115 = vpack.c.b16 %v103, %v101
    %v116 = vpack.c.b16 %v104, %v104
    %v117 = vpack.c.b16 %v105, %v105
    %vm128 = vcmask 719872
    %v130 = vsel %vm128, %v49, 0
    %vm132 = vcmask 1043456
    %v134 = vsel %vm132, %v116, 0
    %v137 = vsel %vm132, %v117, 0
    %139 = vmatprep.subr.bf16.mxu0 %v107
    %140 = vmatpush1.bf16.msra.mxu0 %v106
    %141 = vmatprep.subr.bf16.mxu0 %v109
    %142 = vmatpush1.bf16.msra.mxu0 %v108
    %143 = vmatprep.subr.bf16.mxu0 %v111
    %144 = vmatpush1.bf16.msra.mxu0 %v110
    %145 = vmatprep.subr.bf16.mxu0 %v113
    %146 = vmatpush1.bf16.msra.mxu0 %v112
    %147 = vmatprep.subr.bf16.mxu0 %v115
    %148 = vmatpush1.bf16.msra.mxu0 %v114
    %149 = vmatprep.subr.bf16.mxu0 %v137
    %150 = vmatpush1.bf16.msra.mxu0 %v134
    %151 = vmatprep.subr.bf16.mxu0 0
    %152 = vmatpush1.bf16.msra.mxu0 0
    %153 = vmatprep.subr.bf16.mxu0 0
    %154 = vmatpush1.bf16.msra.mxu0 0
    %155 = vmatprep.subr.bf16.mxu0 0
    %156 = vmatpush1.bf16.msra.mxu0 0
    %157 = vmatprep.subr.bf16.mxu0 0
    %158 = vmatpush1.bf16.msra.mxu0 0
    %159 = vmatprep.subr.bf16.mxu0 0
    %160 = vmatpush1.bf16.msra.mxu0 0
    %161 = vmatprep.subr.bf16.mxu0 0
    %162 = vmatpush1.bf16.msra.mxu0 0
    %163 = vmatprep.subr.bf16.mxu0 0
    %164 = vmatpush1.bf16.msra.mxu0 0
    %165 = vmatprep.subr.bf16.mxu0 0
    %166 = vmatpush1.bf16.msra.mxu0 0
    %167 = vmatprep.subr.bf16.mxu0 0
    %168 = vmatpush1.bf16.msra.mxu0 0
    %169 = vmatprep.subr.bf16.mxu0 0
    %170 = vmatpush1.bf16.msra.mxu0 0
    %171 = vmatprep.mubr.bf16.mxu0 0
    %172 = vmatmul.mubr.bf16.gmra.mrb[0].mxu0 %v130
    %v173 = vpop.f32.mrb[0].mxu0
    %v174 = vadd.f32 %v66, %v173
    %v175 = vpop.f32.mrb[0].mxu0
    %v176 = vadd.f32 %v70, %v175
    %v177 = vpop.f32.mrb[0].mxu0
    %v178 = vpop.f32.mrb[0].mxu0
    %179 = vdwg.mxu0
    %v180 = vmax.f32 %v174, 0.0
    %v181 = vmax.f32 %v176, 0.0
    %v182 = vld [vmem:[%s3] sm:$0x3]
    %v184 = vlaneseq
    %v185 = vshrl.u32 %v184, 7
    %v186 = vsub.s32 0, %v185
    %v187 = vrot.slane %v182, %v186
    %v188 = vlaneseq
    %v189 = vshrl.u32 %v188, 7
    %v190 = vsub.s32 1, %v189
    %v191 = vrot.slane %v182, %v190
    %v194 = vmul.f32 %v180, %v187
    %v195 = vmul.f32 %v181, %v191
    %v196 = vadd.f32 %v194, %v195
    %197 = vadd.xlane.f32.xlu0 %v196
    %v198 = vpop.xlane.xlu0 %197
    %s199 = sld [smem:[#allocation2]]
    %v200 = vstv %s199
    %v201 = vadd.f32 %v198, %v200
    %vm202 = vcmask 7168
    %203 = vst.msk [vmem:[%s5] sm:$0xff] %vm202, %v201
    // Predicated region
    $region30: #{tpu_custom_call.1} parent=1 // pred_check
      _
    $region31: #{tpu_custom_call.1} parent=1 // pred_check_branch
      %205 = sbr.rel (0) target = $region33
    $region32: #{tpu_custom_call.1} parent=1 // pred_region
      _
    $region33: #{tpu_custom_call.1} parent=1 // pred_fallthru
      _
    // Predicated region
    $region34: #{tpu_custom_call.1} parent=1 // pred_check
      _
    $region35: #{tpu_custom_call.1} parent=1 // pred_check_branch
      %207 = sbr.rel (0) target = $region37
    $region36: #{tpu_custom_call.1} parent=1 // pred_region
      _
    $region37: #{tpu_custom_call.1} parent=1 // pred_fallthru
      _
    %208 = vsyncpa [#allocation4], 1
    %209 = vsyncpa [#allocation6], 1

</llo_original>
